<compile_context>
chip_gen: v6e
topology: v6e:2x2x1
jax: 0.10.0
libtpu: 0.0.40
codegen_flags: <defaults>
</compile_context>

<pallas_src>
import jax
import jax.numpy as jnp
from jax.experimental import pallas as pl
from jax.experimental.pallas import tpu as pltpu


def _make_kernel(n_true_nodes, n_rows, node_tile, fold, d):
    """Kernel with static shapes baked in.

    n_true_nodes: real node count N (mean denominator).
    n_rows:       streamed row count (N // fold).
    node_tile:    rows per streamed block.
    fold:         lane-fold factor (f*D lanes per row; 1 = unfolded).
    d:            true feature dim D.
    """
    inv_n = 1.0 / float(n_true_nodes)
    rem = n_rows % node_tile  # static; 0 => every tile is full

    def kernel(x_ref, w1_ref, b1_ref, w2_ref, b2_ref, o_ref, acc_ref):
        n = pl.program_id(1)
        last = pl.num_programs(1) - 1

        @pl.when(n == 0)
        def _init():
            acc_ref[...] = jnp.zeros_like(acc_ref)

        if rem == 0:
            # All tiles full: plain cast + sublane reduce, no masking.
            acc_ref[...] += jnp.sum(x_ref[...].astype(jnp.float32), axis=1)
        else:
            @pl.when(n != last)
            def _full_tile():
                acc_ref[...] += jnp.sum(x_ref[...].astype(jnp.float32), axis=1)

            @pl.when(n == last)
            def _partial_tile():
                # Static slice of the valid remainder rows — no iota / select.
                acc_ref[...] += jnp.sum(
                    x_ref[:, :rem, :].astype(jnp.float32), axis=1)

        @pl.when(n == last)
        def _finalize():
            acc = acc_ref[...]
            # Fold the `fold` lane-groups back to D features (no-op when fold == 1).
            g = acc[:, 0:d]
            for i in range(1, fold):
                g = g + acc[:, i * d:(i + 1) * d]
            g = g * inv_n                                            # mean pool (TB, D)
            h = jnp.dot(g, w1_ref[...],
                        preferred_element_type=jnp.float32) + b1_ref[...]
            h = jnp.maximum(h, 0.0)                                  # ReLU
            out = jnp.dot(h, w2_ref[...],
                          preferred_element_type=jnp.float32) + b2_ref[...]
            o_ref[...] = out.astype(o_ref.dtype)

    return kernel


def contrastive_head(node_vecs, w1, b1, w2, b2, *,
                     batch_tile=None, node_tile=None,
                     vmem_limit_bytes=None):
    """Fused mean-pool + 2-layer MLP.

    node_vecs: (B, N, D); w1: (D, H); b1: (1, H); w2: (H, H); b2: (1, H).
    Matches PyTorch ContrastiveHead(pool_type='mean').forward.
    """
    B, N, D = node_vecs.shape
    H = w1.shape[1]
    itemsize = jnp.dtype(node_vecs.dtype).itemsize

    # --- generation-aware VMEM budget / block target ------------------------
    try:
        vmem_cap = pltpu.get_tpu_info().vmem_capacity_bytes
    except Exception:
        vmem_cap = 64 * 1024 * 1024                      # conservative (v7x-sized)
    if vmem_cap >= 100 * 1024 * 1024:                    # v5e / v6e: 128 MiB VMEM
        target_block_bytes = 8 * 1024 * 1024
        default_vmem_limit = 96 * 1024 * 1024
    else:                                                # v7x-class: 64 MiB per TC
        target_block_bytes = 4 * 1024 * 1024
        default_vmem_limit = 48 * 1024 * 1024
    if vmem_limit_bytes is None:
        vmem_limit_bytes = default_vmem_limit

    # --- lane-densify small feature dims (free row-major reshape, no HBM copy) ---
    fold = 1
    if D < 128 and 128 % D == 0 and N % (128 // D) == 0:
        fold = 128 // D
    lane_w = fold * D
    n_rows = N // fold
    x = node_vecs if fold == 1 else node_vecs.reshape(B, n_rows, lane_w)

    # --- batch tiling (>= 2 batch tiles when possible -> megacore shards on v7x) ---
    if batch_tile is None:
        if B <= 8:
            batch_tile = B
        else:
            bt = -(-B // 2)                      # cdiv(B, 2)
            bt = ((bt + 7) // 8) * 8             # sublane-align
            batch_tile = min(bt, 128)
    batch_tile = max(1, min(batch_tile, B))

    # --- node tiling (align to dtype sublane granule) ------------------------
    granule = max(8, 32 // itemsize)             # 8 f32 / 16 bf16 / 32 int8
    if node_tile is None:
        nt = max(1, target_block_bytes // max(1, batch_tile * lane_w * itemsize))
        node_tile = n_rows if nt >= n_rows else max(granule, (nt // granule) * granule)
    node_tile = min(node_tile, n_rows)

    grid = (pl.cdiv(B, batch_tile), pl.cdiv(n_rows, node_tile))
    kernel = _make_kernel(N, n_rows, node_tile, fold, D)

    cost = pl.CostEstimate(
        flops=2 * B * N * D + 2 * B * (D * H + H * H),
        transcendentals=0,
        bytes_accessed=B * N * D * itemsize
        + (D * H + H + H * H + H) * 4
        + B * H * 4,
    )

    return pl.pallas_call(
        kernel,
        out_shape=jax.ShapeDtypeStruct((B, H), jnp.float32),
        grid_spec=pltpu.PrefetchScalarGridSpec(
            num_scalar_prefetch=0,
            grid=grid,
            in_specs=[
                # streamed (lane-dense) node blocks
                pl.BlockSpec((batch_tile, node_tile, lane_w), lambda b, n: (b, n, 0)),
                # weights / biases: resident, same block every grid step
                pl.BlockSpec((D, H), lambda b, n: (0, 0)),
                pl.BlockSpec((1, H), lambda b, n: (0, 0)),
                pl.BlockSpec((H, H), lambda b, n: (0, 0)),
                pl.BlockSpec((1, H), lambda b, n: (0, 0)),
            ],
            out_specs=pl.BlockSpec((batch_tile, H), lambda b, n: (b, 0)),
            scratch_shapes=[pltpu.VMEM((batch_tile, lane_w), jnp.float32)],
        ),
        compiler_params=pltpu.CompilerParams(
            dimension_semantics=("parallel", "arbitrary"),
            vmem_limit_bytes=vmem_limit_bytes,
        ),
        cost_estimate=cost,
    )(x, w1, b1, w2, b2)


def reference(node_vecs, w1, b1, w2, b2):
    g = jnp.mean(node_vecs.astype(jnp.float32), axis=1)
    h = jnp.maximum(g @ w1 + b1, 0.0)
    return h @ w2 + b2


if __name__ == "__main__":
    # Small shapes consistent with the module's forward: input_dim = hidden_dim = 32.
    B, D, H = 2, 32, 32

    key = jax.random.PRNGKey(0)
    kx1, kx2, kw1, kb1, kw2, kb2 = jax.random.split(key, 6)

    # Weights stored (in, out) so kernel's x @ W + b == PyTorch's x @ weight.T + bias.
    w1 = jax.random.normal(kw1, (D, H), dtype=jnp.float32) * (1.0 / jnp.sqrt(D))
    b1 = jax.random.normal(kb1, (1, H), dtype=jnp.float32) * 0.01
    w2 = jax.random.normal(kw2, (H, H), dtype=jnp.float32) * (1.0 / jnp.sqrt(H))
    b2 = jax.random.normal(kb2, (1, H), dtype=jnp.float32) * 0.01

    # Tolerance covers possible MXU f32-matmul pass-count differences between the
    # in-kernel dots and XLA's reference dots; structural bugs are far larger.
    ATOL = RTOL = 2e-3

    # 1) N divisible by the lane-fold factor (4 for D=32) -> lane-dense path.
    #    node_tile=8 over 20 folded rows -> 3 node tiles, last one partial
    #    (exercises accumulator + static-slice remainder branch).
    N1 = 80
    x1 = jax.random.normal(kx1, (B, N1, D), dtype=jnp.float32)
    ref1 = reference(x1, w1, b1, w2, b2)
    out1 = jax.block_until_ready(contrastive_head(x1, w1, b1, w2, b2, node_tile=8))
    assert out1.shape == (B, H)
    assert jnp.allclose(out1, ref1, atol=ATOL, rtol=RTOL), "tiled (folded) mismatch"

    # 2) Auto tile sizing (single node tile at these toy shapes), folded path.
    out2 = jax.block_until_ready(contrastive_head(x1, w1, b1, w2, b2))
    assert jnp.allclose(out2, ref1, atol=ATOL, rtol=RTOL), "auto-tile mismatch"

    # 3) N NOT divisible by the fold factor -> unfolded fallback path,
    #    multi-tile with a partial last node tile (rem = 19 % 8 = 3).
    N2 = 19
    x2 = jax.random.normal(kx2, (B, N2, D), dtype=jnp.float32)
    ref2 = reference(x2, w1, b1, w2, b2)
    out3 = jax.block_until_ready(contrastive_head(x2, w1, b1, w2, b2, node_tile=8))
    assert jnp.allclose(out3, ref2, atol=ATOL, rtol=RTOL), "unfolded fallback mismatch"

    print("KERNEL_OK")
</pallas_src>

<mosaic_0001>
module attributes {stable_mosaic.version = 11 : i64} {
  func.func @kernel(%arg0: i32, %arg1: i32, %arg2: memref<2x8x128xf32, #tpu.memory_space<vmem>>, %arg3: memref<32x32xf32, #tpu.memory_space<vmem>>, %arg4: memref<1x32xf32, #tpu.memory_space<vmem>>, %arg5: memref<32x32xf32, #tpu.memory_space<vmem>>, %arg6: memref<1x32xf32, #tpu.memory_space<vmem>>, %arg7: memref<2x32xf32, #tpu.memory_space<vmem>>, %arg8: memref<2x128xf32, #tpu.memory_space<vmem>>) attributes {dimension_semantics = [#tpu.dimension_semantics<parallel>, #tpu.dimension_semantics<arbitrary>], iteration_bounds = array<i64: 1, 3>, scalar_prefetch = 0 : i64, scratch_operands = 1 : i64, tpu.core_type = #tpu.core_type<tc>, window_params = [{transform_indices = @transform_0, window_bounds = array<i64: 2, 8, 128>}, {pipeline_mode = #tpu.pipeline_mode<synchronous>, transform_indices = @transform_1, window_bounds = array<i64: 32, 32>}, {pipeline_mode = #tpu.pipeline_mode<synchronous>, transform_indices = @transform_2, window_bounds = array<i64: 1, 32>}, {pipeline_mode = #tpu.pipeline_mode<synchronous>, transform_indices = @transform_3, window_bounds = array<i64: 32, 32>}, {pipeline_mode = #tpu.pipeline_mode<synchronous>, transform_indices = @transform_4, window_bounds = array<i64: 1, 32>}, {transform_indices = @transform_5, window_bounds = array<i64: 2, 32>}]} {
    %c0_i32 = arith.constant 0 : i32
    %0 = arith.cmpi eq, %arg1, %c0_i32 : i32
    %1 = arith.extui %0 : i1 to i32
    %c0_i32_0 = arith.constant 0 : i32
    %2 = arith.cmpi ne, %1, %c0_i32_0 : i32
    scf.if %2 {
      %cst = arith.constant 0.000000e+00 : f32
      %12 = vector.broadcast %cst : f32 to vector<2x128xf32>
      %c0 = arith.constant 0 : index
      %c0_6 = arith.constant 0 : index
      %13 = vector.load %arg8[%c0, %c0_6] : memref<2x128xf32, #tpu.memory_space<vmem>>, vector<2x128xf32>
      tpu.vector_store %arg8[%c0, %c0_6], %12 {strides = array<i32>} : memref<2x128xf32, #tpu.memory_space<vmem>>, vector<2x128xf32>,
    } else {
    }
    %c2_i32 = arith.constant 2 : i32
    %3 = arith.cmpi ne, %arg1, %c2_i32 : i32
    %4 = arith.extui %3 : i1 to i32
    %c0_i32_1 = arith.constant 0 : i32
    %5 = arith.cmpi ne, %4, %c0_i32_1 : i32
    scf.if %5 {
      %c0 = arith.constant 0 : index
      %c0_6 = arith.constant 0 : index
      %12 = vector.load %arg8[%c0, %c0_6] : memref<2x128xf32, #tpu.memory_space<vmem>>, vector<2x128xf32>
      %c0_7 = arith.constant 0 : index
      %c0_8 = arith.constant 0 : index
      %c0_9 = arith.constant 0 : index
      %13 = vector.load %arg2[%c0_7, %c0_8, %c0_9] : memref<2x8x128xf32, #tpu.memory_space<vmem>>, vector<2x8x128xf32>
      %cst = arith.constant dense<0.000000e+00> : vector<2x128xf32>
      %14 = vector.multi_reduction <add>, %13, %cst [1] : vector<2x8x128xf32> to vector<2x128xf32>
      %15 = arith.addf %12, %14 : vector<2x128xf32>
      %c0_10 = arith.constant 0 : index
      %c0_11 = arith.constant 0 : index
      %16 = vector.load %arg8[%c0_10, %c0_11] : memref<2x128xf32, #tpu.memory_space<vmem>>, vector<2x128xf32>
      tpu.vector_store %arg8[%c0_10, %c0_11], %15 {strides = array<i32>} : memref<2x128xf32, #tpu.memory_space<vmem>>, vector<2x128xf32>,
    } else {
    }
    %c2_i32_2 = arith.constant 2 : i32
    %6 = arith.cmpi eq, %arg1, %c2_i32_2 : i32
    %7 = arith.extui %6 : i1 to i32
    %c0_i32_3 = arith.constant 0 : i32
    %8 = arith.cmpi ne, %7, %c0_i32_3 : i32
    scf.if %8 {
      %c0 = arith.constant 0 : index
      %c0_6 = arith.constant 0 : index
      %12 = vector.load %arg8[%c0, %c0_6] : memref<2x128xf32, #tpu.memory_space<vmem>>, vector<2x128xf32>
      %c0_7 = arith.constant 0 : index
      %c0_8 = arith.constant 0 : index
      %c0_9 = arith.constant 0 : index
      %13 = vector.load %arg2[%c0_7, %c0_8, %c0_9] : memref<2x8x128xf32, #tpu.memory_space<vmem>>, vector<2x4x128xf32>
      %cst = arith.constant dense<0.000000e+00> : vector<2x128xf32>
      %14 = vector.multi_reduction <add>, %13, %cst [1] : vector<2x4x128xf32> to vector<2x128xf32>
      %15 = arith.addf %12, %14 : vector<2x128xf32>
      %c0_10 = arith.constant 0 : index
      %c0_11 = arith.constant 0 : index
      %16 = vector.load %arg8[%c0_10, %c0_11] : memref<2x128xf32, #tpu.memory_space<vmem>>, vector<2x128xf32>
      tpu.vector_store %arg8[%c0_10, %c0_11], %15 {strides = array<i32>} : memref<2x128xf32, #tpu.memory_space<vmem>>, vector<2x128xf32>,
    } else {
    }
    %c2_i32_4 = arith.constant 2 : i32
    %9 = arith.cmpi eq, %arg1, %c2_i32_4 : i32
    %10 = arith.extui %9 : i1 to i32
    %c0_i32_5 = arith.constant 0 : i32
    %11 = arith.cmpi ne, %10, %c0_i32_5 : i32
    scf.if %11 {
      %c0 = arith.constant 0 : index
      %c0_6 = arith.constant 0 : index
      %12 = vector.load %arg8[%c0, %c0_6] : memref<2x128xf32, #tpu.memory_space<vmem>>, vector<2x128xf32>
      %13 = vector.extract_strided_slice %12 {offsets = [0, 0], sizes = [2, 32], strides = [1, 1]} : vector<2x128xf32> to vector<2x32xf32>
      %14 = vector.extract_strided_slice %12 {offsets = [0, 32], sizes = [2, 32], strides = [1, 1]} : vector<2x128xf32> to vector<2x32xf32>
      %15 = arith.addf %13, %14 : vector<2x32xf32>
      %16 = vector.extract_strided_slice %12 {offsets = [0, 64], sizes = [2, 32], strides = [1, 1]} : vector<2x128xf32> to vector<2x32xf32>
      %17 = arith.addf %15, %16 : vector<2x32xf32>
      %18 = vector.extract_strided_slice %12 {offsets = [0, 96], sizes = [2, 32], strides = [1, 1]} : vector<2x128xf32> to vector<2x32xf32>
      %19 = arith.addf %17, %18 : vector<2x32xf32>
      %cst = arith.constant 1.250000e-02 : f32
      %20 = vector.broadcast %cst : f32 to vector<2x32xf32>
      %21 = arith.mulf %19, %20 : vector<2x32xf32>
      %c0_7 = arith.constant 0 : index
      %c0_8 = arith.constant 0 : index
      %22 = vector.load %arg3[%c0_7, %c0_8] : memref<32x32xf32, #tpu.memory_space<vmem>>, vector<32x32xf32>
      %cst_9 = arith.constant dense<0.000000e+00> : vector<2x32xf32>
      %23 = tpu.matmul %21, %22, %cst_9 {dimension_numbers = #tpu.dot_dimension_numbers<[1], [0], [0], [1], [0, 0, 1, 1], [], []>} : vector<2x32xf32>, vector<32x32xf32>, vector<2x32xf32> -> vector<2x32xf32>
      %c0_10 = arith.constant 0 : index
      %c0_11 = arith.constant 0 : index
      %24 = vector.load %arg4[%c0_10, %c0_11] : memref<1x32xf32, #tpu.memory_space<vmem>>, vector<1x32xf32>
      %25 = vector.broadcast %24 : vector<1x32xf32> to vector<2x32xf32>
      %26 = arith.addf %23, %25 : vector<2x32xf32>
      %cst_12 = arith.constant 0.000000e+00 : f32
      %27 = vector.broadcast %cst_12 : f32 to vector<2x32xf32>
      %28 = arith.maximumf %26, %27 : vector<2x32xf32>
      %c0_13 = arith.constant 0 : index
      %c0_14 = arith.constant 0 : index
      %29 = vector.load %arg5[%c0_13, %c0_14] : memref<32x32xf32, #tpu.memory_space<vmem>>, vector<32x32xf32>
      %cst_15 = arith.constant dense<0.000000e+00> : vector<2x32xf32>
      %30 = tpu.matmul %28, %29, %cst_15 {dimension_numbers = #tpu.dot_dimension_numbers<[1], [0], [0], [1], [0, 0, 1, 1], [], []>} : vector<2x32xf32>, vector<32x32xf32>, vector<2x32xf32> -> vector<2x32xf32>
      %c0_16 = arith.constant 0 : index
      %c0_17 = arith.constant 0 : index
      %31 = vector.load %arg6[%c0_16, %c0_17] : memref<1x32xf32, #tpu.memory_space<vmem>>, vector<1x32xf32>
      %32 = vector.broadcast %31 : vector<1x32xf32> to vector<2x32xf32>
      %33 = arith.addf %30, %32 : vector<2x32xf32>
      %c0_18 = arith.constant 0 : index
      %c0_19 = arith.constant 0 : index
      %34 = vector.load %arg7[%c0_18, %c0_19] : memref<2x32xf32, #tpu.memory_space<vmem>>, vector<2x32xf32>
      tpu.vector_store %arg7[%c0_18, %c0_19], %33 {strides = array<i32>} : memref<2x32xf32, #tpu.memory_space<vmem>>, vector<2x32xf32>,
    } else {
    }
    return
  }
  func.func @transform_0(%arg0: i32, %arg1: i32) -> (i32, i32, i32) {
    %c0_i32 = arith.constant 0 : i32
    %c0_i32_0 = arith.constant 0 : i32
    return %arg0, %arg1, %c0_i32 : i32, i32, i32
  }
  func.func @transform_1(%arg0: i32, %arg1: i32) -> (i32, i32) {
    %c0_i32 = arith.constant 0 : i32
    %c0_i32_0 = arith.constant 0 : i32
    %c0_i32_1 = arith.constant 0 : i32
    return %c0_i32, %c0_i32_0 : i32, i32
  }
  func.func @transform_2(%arg0: i32, %arg1: i32) -> (i32, i32) {
    %c0_i32 = arith.constant 0 : i32
    %c0_i32_0 = arith.constant 0 : i32
    %c0_i32_1 = arith.constant 0 : i32
    return %c0_i32, %c0_i32_0 : i32, i32
  }
  func.func @transform_3(%arg0: i32, %arg1: i32) -> (i32, i32) {
    %c0_i32 = arith.constant 0 : i32
    %c0_i32_0 = arith.constant 0 : i32
    %c0_i32_1 = arith.constant 0 : i32
    return %c0_i32, %c0_i32_0 : i32, i32
  }
  func.func @transform_4(%arg0: i32, %arg1: i32) -> (i32, i32) {
    %c0_i32 = arith.constant 0 : i32
    %c0_i32_0 = arith.constant 0 : i32
    %c0_i32_1 = arith.constant 0 : i32
    return %c0_i32, %c0_i32_0 : i32, i32
  }
  func.func @transform_5(%arg0: i32, %arg1: i32) -> (i32, i32) {
    %c0_i32 = arith.constant 0 : i32
    %c0_i32_0 = arith.constant 0 : i32
    return %arg0, %c0_i32 : i32, i32
  }
}

</mosaic_0001>

<llo_original>
// kernel: tpu_custom_call.1
$region0: #{tpu_custom_call.1}
  #allocation0 [shape = 'u32[]', space=smem, size = 0x4, offset = 0x4, fixed_abs, tag = 'smem constant byte address 0x4 - core index']
  #allocation1 [shape = 'u32[144,128]{1,0:T(1,128)}', space=vmem, size = 0x12000, scoped, tag = 'internal scratch']
  #allocation2 [shape = 'f32[2,128]{1,0:T(2,128)}', space=vmem, size = 0x400, scoped, tag = 'scratch operand']
  %s0 = inlined_call_operand.vmem [shape: f32[2,20,128], index: 0, kind: input, shape index: {}]
  %s1 = inlined_call_operand.vmem [shape: f32[32,32], index: 1, kind: input, shape index: {}]
  %s2 = inlined_call_operand.vmem [shape: f32[1,32], index: 2, kind: input, shape index: {}]
  %s3 = inlined_call_operand.vmem [shape: f32[32,32], index: 3, kind: input, shape index: {}]
  %s4 = inlined_call_operand.vmem [shape: f32[1,32], index: 4, kind: input, shape index: {}]
  %s5 = inlined_call_operand.hbm [shape: f32[2,32], index: 5, kind: output, shape index: {}]
  %s6 = sld [smem:[#allocation0]]
  $region103: #{tpu_custom_call.1} parent=0
    _
  %s8 = ssub.s32 1, %s6
  %s9 = scalar_select 0, %s8, %s6
  $region1: #{tpu_custom_call.1} parent=0
    #allocation3 [shape = 'u8[16384]{0}', space=vmem, size = 0x4000, scoped, tag = 'input window, operand 0']
    #allocation4 [shape = 'u8[1024]{0}', space=vmem, size = 0x400, scoped, tag = 'output window, operand 0, single buffered']
    #allocation5 [shape = 's32[2]{0}', space=sflag, size = 0x8, scoped, tag = 'scoped memory for tpu_custom_call.1']
    %10 = vsyncpa [#allocation5], 0
    loop: start=0, step=1, limit=5
    $region2: #{tpu_custom_call.1} parent=1 // loop_pre_header
      _
    $region3: #{tpu_custom_call.1} parent=1 // loop_header
      %s12 = sphi 0, %s16
      %p13 = scmp.ge.s32.totalorder %s12, 5
      %s19 = sphi 0, %s31
      %s20 = sphi 0, %s27
      %s21 = sphi 0, %s19
      %s22 = sphi 0, %s20
      %s23 = sphi 0, %s21
      %s24 = sphi 0, %s22
      %s36 = sphi 0, %s38
      %s39 = sphi 0, %s36
      %s40 = sphi 0, %s39
      %s56 = sphi 0, %s40
      %s60 = sphi 0, %s60
      %s62 = sphi 0, %s60
      %s63 = sphi 0, %s62
      %s77 = sphi 0, %s63
      %s81 = sphi 0, %s81
      %s83 = sphi 0, %s81
      %s84 = sphi 0, %s83
      %s98 = sphi 0, %s84
      %s102 = sphi 0, %s102
      %s104 = sphi 0, %s102
      %s105 = sphi 0, %s104
      %s119 = sphi 0, %s105
      %s123 = sphi 0, %s123
      %s125 = sphi 0, %s123
      %s126 = sphi 0, %s125
      %s140 = sphi 0, %s126
      %s146 = sphi 0, %s148
      %s149 = sphi 0, %s146
      %s150 = sphi 0, %s149
      %s166 = sphi 0, %s150
    $region4: #{tpu_custom_call.1} parent=1 // loop_header_branch
      %15 = sbr.rel (%p13) target = $region8
    $region5: #{tpu_custom_call.1} parent=1 // loop_body
      %s17 = ssub.s32 %s12, 1
      %s18 = ssub.s32 %s12, 2
      %s25 = sadd.s32 1, %s20
      %p26 = scmp.ge.s32.totalorder %s25, 3
      %s27 = scalar_select %p26, 0, %s25
      %s28 = sadd.s32 1, %s19
      %s29 = scalar_select %p26, %s28, %s19
      %p30 = scmp.ge.s32.totalorder %s29, 1
      %s31 = scalar_select %p30, 0, %s29
      %s32 = ssub.s32 %s19, %s31
      %s33 = ssub.s32 %s20, %s27
      %s34 = sor.u32 %s32, %s33
      %p35 = scmp.eq.s32.totalorder %s34, 0
      %s37 = sadd.s32 %s36, 1
      %s38 = scalar_select %p35, %s36, %s37
      %p41 = pneg %p35
      %p42 = scmp.eq.s32.totalorder %s12, 2
      %p43 = por %p41, %p42
      %p44 = scmp.ne.s32.totalorder %s36, %s39
      %p45 = scmp.eq.s32.totalorder %s12, 0
      %p46 = por %p44, %p45
      %p47 = scmp.ne.s32.totalorder %s36, %s39
      %p48 = scmp.eq.s32.totalorder %s17, 2
      %p49 = por %p47, %p48
      %p50 = scmp.ne.s32.totalorder %s39, %s40
      %p51 = scmp.eq.s32.totalorder %s17, 0
      %p52 = por %p50, %p51
      %p53 = scmp.ne.s32.totalorder %s39, %s40
      %p54 = scmp.eq.s32.totalorder %s18, 2
      %p55 = por %p53, %p54
      %p57 = scmp.ne.s32.totalorder %s40, %s56
      %p58 = scmp.eq.s32.totalorder %s18, 0
      %p59 = por %p57, %p58
      %s61 = sadd.s32 %s60, 1
      %p64 = scmp.eq.s32.totalorder %s12, 2
      %p65 = scmp.ne.s32.totalorder %s60, %s62
      %p66 = scmp.eq.s32.totalorder %s12, 0
      %p67 = por %p65, %p66
      %p68 = scmp.ne.s32.totalorder %s60, %s62
      %p69 = scmp.eq.s32.totalorder %s17, 2
      %p70 = por %p68, %p69
      %p71 = scmp.ne.s32.totalorder %s62, %s63
      %p72 = scmp.eq.s32.totalorder %s17, 0
      %p73 = por %p71, %p72
      %p74 = scmp.ne.s32.totalorder %s62, %s63
      %p75 = scmp.eq.s32.totalorder %s18, 2
      %p76 = por %p74, %p75
      %p78 = scmp.ne.s32.totalorder %s63, %s77
      %p79 = scmp.eq.s32.totalorder %s18, 0
      %p80 = por %p78, %p79
      %s82 = sadd.s32 %s81, 1
      %p85 = scmp.eq.s32.totalorder %s12, 2
      %p86 = scmp.ne.s32.totalorder %s81, %s83
      %p87 = scmp.eq.s32.totalorder %s12, 0
      %p88 = por %p86, %p87
      %p89 = scmp.ne.s32.totalorder %s81, %s83
      %p90 = scmp.eq.s32.totalorder %s17, 2
      %p91 = por %p89, %p90
      %p92 = scmp.ne.s32.totalorder %s83, %s84
      %p93 = scmp.eq.s32.totalorder %s17, 0
      %p94 = por %p92, %p93
      %p95 = scmp.ne.s32.totalorder %s83, %s84
      %p96 = scmp.eq.s32.totalorder %s18, 2
      %p97 = por %p95, %p96
      %p99 = scmp.ne.s32.totalorder %s84, %s98
      %p100 = scmp.eq.s32.totalorder %s18, 0
      %p101 = por %p99, %p100
      %s103 = sadd.s32 %s102, 1
      %p106 = scmp.eq.s32.totalorder %s12, 2
      %p107 = scmp.ne.s32.totalorder %s102, %s104
      %p108 = scmp.eq.s32.totalorder %s12, 0
      %p109 = por %p107, %p108
      %p110 = scmp.ne.s32.totalorder %s102, %s104
      %p111 = scmp.eq.s32.totalorder %s17, 2
      %p112 = por %p110, %p111
      %p113 = scmp.ne.s32.totalorder %s104, %s105
      %p114 = scmp.eq.s32.totalorder %s17, 0
      %p115 = por %p113, %p114
      %p116 = scmp.ne.s32.totalorder %s104, %s105
      %p117 = scmp.eq.s32.totalorder %s18, 2
      %p118 = por %p116, %p117
      %p120 = scmp.ne.s32.totalorder %s105, %s119
      %p121 = scmp.eq.s32.totalorder %s18, 0
      %p122 = por %p120, %p121
      %s124 = sadd.s32 %s123, 1
      %p127 = scmp.eq.s32.totalorder %s12, 2
      %p128 = scmp.ne.s32.totalorder %s123, %s125
      %p129 = scmp.eq.s32.totalorder %s12, 0
      %p130 = por %p128, %p129
      %p131 = scmp.ne.s32.totalorder %s123, %s125
      %p132 = scmp.eq.s32.totalorder %s17, 2
      %p133 = por %p131, %p132
      %p134 = scmp.ne.s32.totalorder %s125, %s126
      %p135 = scmp.eq.s32.totalorder %s17, 0
      %p136 = por %p134, %p135
      %p137 = scmp.ne.s32.totalorder %s125, %s126
      %p138 = scmp.eq.s32.totalorder %s18, 2
      %p139 = por %p137, %p138
      %p141 = scmp.ne.s32.totalorder %s126, %s140
      %p142 = scmp.eq.s32.totalorder %s18, 0
      %p143 = por %p141, %p142
      %s144 = ssub.s32 %s19, %s31
      %p145 = scmp.eq.s32.totalorder %s144, 0
      %s147 = sadd.s32 %s146, 1
      %s148 = scalar_select %p145, %s146, %s147
      %p151 = pneg %p145
      %p152 = scmp.eq.s32.totalorder %s12, 2
      %p153 = por %p151, %p152
      %p154 = scmp.ne.s32.totalorder %s146, %s149
      %p155 = scmp.eq.s32.totalorder %s12, 0
      %p156 = por %p154, %p155
      %p157 = scmp.ne.s32.totalorder %s146, %s149
      %p158 = scmp.eq.s32.totalorder %s17, 2
      %p159 = por %p157, %p158
      %p160 = scmp.ne.s32.totalorder %s149, %s150
      %p161 = scmp.eq.s32.totalorder %s17, 0
      %p162 = por %p160, %p161
      %p163 = scmp.ne.s32.totalorder %s149, %s150
      %p164 = scmp.eq.s32.totalorder %s18, 2
      %p165 = por %p163, %p164
      %p167 = scmp.ne.s32.totalorder %s150, %s166
      %p168 = scmp.eq.s32.totalorder %s18, 0
      %p169 = por %p167, %p168
      %p170 = scmp.le.s32.totalorder 1, %s12
      %p171 = scmp.lt.s32.totalorder %s12, 4
      %p172 = pnand %p170, %p171
      %p173 = pneg %p172
      // Predicated region
      $region9: #{tpu_custom_call.1} parent=5 // pred_check
        _
      $region10: #{tpu_custom_call.1} parent=5 // pred_check_branch
        %175 = sbr.rel (%p172) target = $region12
      $region11: #{tpu_custom_call.1} parent=5 // pred_region
        %s176 = ssub.s32 %s12, 1
        // Predicated region
        $region13: #{tpu_custom_call.1} parent=11 // pred_check
          %p177 = pneg %p73
        $region14: #{tpu_custom_call.1} parent=11 // pred_check_branch
          %179 = sbr.rel (%p177) target = $region16
        $region15: #{tpu_custom_call.1} parent=11 // pred_region
          _
        $region16: #{tpu_custom_call.1} parent=11 // pred_fallthru
          _
        // Predicated region
        $region17: #{tpu_custom_call.1} parent=11 // pred_check
          %p180 = pneg %p94
        $region18: #{tpu_custom_call.1} parent=11 // pred_check_branch
          %182 = sbr.rel (%p180) target = $region20
        $region19: #{tpu_custom_call.1} parent=11 // pred_region
          _
        $region20: #{tpu_custom_call.1} parent=11 // pred_fallthru
          _
        // Predicated region
        $region21: #{tpu_custom_call.1} parent=11 // pred_check
          %p183 = pneg %p115
        $region22: #{tpu_custom_call.1} parent=11 // pred_check_branch
          %185 = sbr.rel (%p183) target = $region24
        $region23: #{tpu_custom_call.1} parent=11 // pred_region
          _
        $region24: #{tpu_custom_call.1} parent=11 // pred_fallthru
          _
        // Predicated region
        $region25: #{tpu_custom_call.1} parent=11 // pred_check
          %p186 = pneg %p136
        $region26: #{tpu_custom_call.1} parent=11 // pred_check_branch
          %188 = sbr.rel (%p186) target = $region28
        $region27: #{tpu_custom_call.1} parent=11 // pred_region
          _
        $region28: #{tpu_custom_call.1} parent=11 // pred_fallthru
          _
      $region12: #{tpu_custom_call.1} parent=5 // pred_fallthru
        _
      %p189 = scmp.lt.s32.totalorder %s12, 3
      // Predicated region
      $region29: #{tpu_custom_call.1} parent=5 // pred_check
        %p190 = pneg %p189
      $region30: #{tpu_custom_call.1} parent=5 // pred_check_branch
        %192 = sbr.rel (%p190) target = $region32
      $region31: #{tpu_custom_call.1} parent=5 // pred_region
        // Predicated region
        $region33: #{tpu_custom_call.1} parent=31 // pred_check
          %p193 = pneg %p46
        $region34: #{tpu_custom_call.1} parent=31 // pred_check_branch
          %195 = sbr.rel (%p193) target = $region36
        $region35: #{tpu_custom_call.1} parent=31 // pred_region
          %s196 = sand.u32 %s36, 1
          %s197 = sand.u32 %s36, 1
          %s198 = smul.addr %s197, 16
          %s199 = scalar_lea.vmem [#allocation3], %s198
          %s200 = smul.u32 2, %s19
          %s201 = smul.addr %s200, 3
          %s202 = sadd.s32 %s20, %s201
          %s203 = smul.addr %s202, 8
          %s204 = scalar_lea.vmem %s0, %s203
          // Predicated region
          $region37: #{tpu_custom_call.1} parent=35 // pred_check
            _
          $region38: #{tpu_custom_call.1} parent=35 // pred_check_branch
            %206 = sbr.rel (0) target = $region40
          $region39: #{tpu_custom_call.1} parent=35 // pred_region
            // Predicated region
            $region41: #{tpu_custom_call.1} parent=39 // pred_check
              _
            $region42: #{tpu_custom_call.1} parent=39 // pred_check_branch
              %208 = sbr.rel (0) target = $region44
            $region43: #{tpu_custom_call.1} parent=39 // pred_region
              // Predicated region
              $region56: #{tpu_custom_call.1} parent=43 // pred_check
                _
              $region57: #{tpu_custom_call.1} parent=43 // pred_check_branch
                %226 = sbr.rel (0) target = $region59
              $region58: #{tpu_custom_call.1} parent=43 // pred_region
                loop: start=0, step=1, limit=1
                $region60: #{tpu_custom_call.1} parent=58 // loop_pre_header
                  _
                $region61: #{tpu_custom_call.1} parent=58 // loop_header
                  %s228 = sphi 0, %s232
                  %p229 = scmp.ge.s32.totalorder %s228, 1
                  %s233 = sphi %s204, %s204
                  %s234 = sphi %s199, %s199
                $region62: #{tpu_custom_call.1} parent=58 // loop_header_branch
                  %231 = sbr.rel (%p229) target = $region66
                $region63: #{tpu_custom_call.1} parent=58 // loop_body
                  %v235 = vld [vmem:[%s233] sm:$0xff]
                  %236 = vst [vmem:[%s234] sm:$0xff] %v235
                  %v237 = vld [vmem:[%s233 + $0x18] sm:$0xff]
                  %238 = vst [vmem:[%s234 + $0x8] sm:$0xff] %v237
                $region64: #{tpu_custom_call.1} parent=58 // loop_footer
                  %s232 = sadd.s32 1, %s228
                $region65: #{tpu_custom_call.1} parent=58 // loop_footer_branch
                  %227 = sbr.rel target = $region61
                $region66: #{tpu_custom_call.1} parent=58 // loop_exit
                  _
              $region59: #{tpu_custom_call.1} parent=43 // pred_fallthru
                _
              // Predicated region
              $region67: #{tpu_custom_call.1} parent=43 // pred_check
                _
              $region68: #{tpu_custom_call.1} parent=43 // pred_check_branch
                %240 = sbr.rel target = $region70
              $region69: #{tpu_custom_call.1} parent=43 // pred_region
                _
              $region70: #{tpu_custom_call.1} parent=43 // pred_fallthru
                _
            $region44: #{tpu_custom_call.1} parent=39 // pred_fallthru
              _
            // Predicated region
            $region45: #{tpu_custom_call.1} parent=39 // pred_check
              _
            $region46: #{tpu_custom_call.1} parent=39 // pred_check_branch
              %210 = sbr.rel target = $region48
            $region47: #{tpu_custom_call.1} parent=39 // pred_region
              %s212 = ssub.s32 256, 1
              loop: start=0, step=1, limit=1
              $region49: #{tpu_custom_call.1} parent=47 // loop_pre_header
                _
              $region50: #{tpu_custom_call.1} parent=47 // loop_header
                %s214 = sphi 0, %s218
                %p215 = scmp.ge.s32.totalorder %s214, 1
                %s219 = sphi %s204, %s204
                %s220 = sphi %s199, %s199
              $region51: #{tpu_custom_call.1} parent=47 // loop_header_branch
                %217 = sbr.rel (%p215) target = $region55
              $region52: #{tpu_custom_call.1} parent=47 // loop_body
                %v221 = vld [vmem:[%s219] sm:%s212]
                %222 = vst [vmem:[%s220] sm:%s212] %v221
                %v223 = vld [vmem:[%s219 + $0x18] sm:%s212]
                %224 = vst [vmem:[%s220 + $0x8] sm:%s212] %v223
              $region53: #{tpu_custom_call.1} parent=47 // loop_footer
                %s218 = sadd.s32 1, %s214
              $region54: #{tpu_custom_call.1} parent=47 // loop_footer_branch
                %213 = sbr.rel target = $region50
              $region55: #{tpu_custom_call.1} parent=47 // loop_exit
                _
            $region48: #{tpu_custom_call.1} parent=39 // pred_fallthru
              _
          $region40: #{tpu_custom_call.1} parent=35 // pred_fallthru
            _
          %241 = vnop
        $region36: #{tpu_custom_call.1} parent=31 // pred_fallthru
          _
      $region32: #{tpu_custom_call.1} parent=5 // pred_fallthru
        _
      %p242 = scmp.le.s32.totalorder 1, %s12
      %p243 = scmp.lt.s32.totalorder %s12, 4
      %p244 = pnand %p242, %p243
      %p245 = pneg %p244
      // Predicated region
      $region71: #{tpu_custom_call.1} parent=5 // pred_check
        _
      $region72: #{tpu_custom_call.1} parent=5 // pred_check_branch
        %247 = sbr.rel (%p244) target = $region74
      $region73: #{tpu_custom_call.1} parent=5 // pred_region
        %s248 = ssub.s32 %s12, 1
        %s249 = sand.u32 %s39, 1
        %s250 = sand.u32 %s39, 1
        %s251 = smul.addr %s250, 16
        %s252 = scalar_lea.vmem [#allocation3], %s251
        // Predicated region
        $region75: #{tpu_custom_call.1} parent=73 // pred_check
          %p253 = pneg %p52
        $region76: #{tpu_custom_call.1} parent=73 // pred_check_branch
          %255 = sbr.rel (%p253) target = $region78
        $region77: #{tpu_custom_call.1} parent=73 // pred_region
          _
        $region78: #{tpu_custom_call.1} parent=73 // pred_fallthru
          _
        %s256 = sand.u32 %s39, 1
        %s257 = sand.u32 %s39, 1
        %s258 = smul.addr %s257, 16
        %s259 = scalar_lea.vmem [#allocation3], %s258
        %p260 = pneg %p52
        %p261 = pneg %p49
        %p262 = pneg %p73
        %p263 = pneg %p70
        %p264 = pneg %p94
        %p265 = pneg %p91
        %p266 = pneg %p115
        %p267 = pneg %p112
        %p268 = pneg %p136
        %p269 = pneg %p133
        %p270 = pneg %p162
        %p271 = pneg %p159
        %s272 = smul.u32 2, %s21
        %p273 = scmp.eq.s32.totalorder %s22, 0
        // Predicated region
        $region79: #{tpu_custom_call.1} parent=73 // pred_check
          %p274 = pneg %p273
        $region80: #{tpu_custom_call.1} parent=73 // pred_check_branch
          %276 = sbr.rel (%p274) target = $region82
        $region81: #{tpu_custom_call.1} parent=73 // pred_region
          %277 = vst [vmem:[#allocation2] sm:$0x3] 0.0
        $region82: #{tpu_custom_call.1} parent=73 // pred_fallthru
          _
        %p278 = scmp.ne.s32.totalorder %s22, 2
        // Predicated region
        $region83: #{tpu_custom_call.1} parent=73 // pred_check
          %p279 = pneg %p278
        $region84: #{tpu_custom_call.1} parent=73 // pred_check_branch
          %281 = sbr.rel (%p279) target = $region86
        $region85: #{tpu_custom_call.1} parent=73 // pred_region
          %v282 = vld [vmem:[#allocation2] sm:$0x3]
          %v283 = vld [vmem:[%s252] sm:$0xff]
          %v284 = vld [vmem:[%s252 + $0x8] sm:$0xff]
          %v285 = vrot.slane %v283, 4
          %v286 = vadd.f32 %v283, %v285
          %v287 = vrot.slane %v286, 2
          %v288 = vadd.f32 %v286, %v287
          %v289 = vrot.slane %v288, 1
          %v290 = vadd.f32 %v288, %v289
          %v291 = vrot.slane %v284, 4
          %v292 = vadd.f32 %v284, %v291
          %v293 = vrot.slane %v292, 2
          %v294 = vadd.f32 %v292, %v293
          %v295 = vrot.slane %v294, 1
          %v296 = vadd.f32 %v294, %v295
          %vm299 = vcmask 1041409
          %v300 = vsel %vm299, %v296, %v290
          %v302 = vadd.f32 %v282, %v300
          %303 = vst [vmem:[#allocation2] sm:$0x3] %v302
        $region86: #{tpu_custom_call.1} parent=73 // pred_fallthru
          _
        %p304 = scmp.eq.s32.totalorder %s22, 2
        // Predicated region
        $region87: #{tpu_custom_call.1} parent=73 // pred_check
          %p305 = pneg %p304
        $region88: #{tpu_custom_call.1} parent=73 // pred_check_branch
          %307 = sbr.rel (%p305) target = $region90
        $region89: #{tpu_custom_call.1} parent=73 // pred_region
          %v308 = vld [vmem:[#allocation2] sm:$0x3]
          %v309 = vld [vmem:[%s252] sm:$0xf]
          %v310 = vld [vmem:[%s252 + $0x8] sm:$0xf]
          %vm311 = vcmask 1043456
          %v312 = vsel %vm311, %v309, 0.0
          %v313 = vrot.slane %v312, 4
          %v314 = vadd.f32 %v312, %v313
          %v315 = vrot.slane %v314, 2
          %v316 = vadd.f32 %v314, %v315
          %v317 = vrot.slane %v316, 1
          %v318 = vadd.f32 %v316, %v317
          %v319 = vsel %vm311, %v310, 0.0
          %v320 = vrot.slane %v319, 4
          %v321 = vadd.f32 %v319, %v320
          %v322 = vrot.slane %v321, 2
          %v323 = vadd.f32 %v321, %v322
          %v324 = vrot.slane %v323, 1
          %v325 = vadd.f32 %v323, %v324
          %vm328 = vcmask 1041409
          %v329 = vsel %vm328, %v325, %v318
          %v331 = vadd.f32 %v308, %v329
          %332 = vst [vmem:[#allocation2] sm:$0x3] %v331
          %v333 = vld [vmem:[#allocation2] sm:$0x3]
          %335 = vrot.lane.b32.xlu0 %v333, 96
          %v336 = vpop.permute.xlu0 %335
          %v338 = vadd.f32 %v333, %v336
          %339 = vrot.lane.b32.xlu0 %v333, 64
          %v340 = vpop.permute.xlu0 %339
          %v342 = vadd.f32 %v338, %v340
          %343 = vrot.lane.b32.xlu0 %v333, 32
          %v344 = vpop.permute.xlu0 %343
          %v346 = vadd.f32 %v342, %v344
          %v347 = vmul.f32 %v346, 0.0125
          %v348 = vld [vmem:[%s1] sm:$0xff]
          %v349 = vld [vmem:[%s1 + $0x8] sm:$0xff]
          %v350 = vld [vmem:[%s1 + $0x10] sm:$0xff]
          %v351 = vld [vmem:[%s1 + $0x18] sm:$0xff]
          %v352 = vld [vmem:[%s2] sm:$0x1]
          %v354 = vlaneseq
          %v355 = vshrl.u32 %v354, 7
          %v356 = vsub.s32 0, %v355
          %v357 = vrot.slane %v352, %v356
          %vm359 = vcmask 261120
          %v361 = vsel %vm359, %v347, 0
          %363 = vmatprep.subr.mxu0 0.0
          %364 = vmatpush1.msra.mxu0 0.0
          %365 = vmatprep.subr.mxu0 0.0
          %366 = vmatpush1.msra.mxu0 0.0
          %367 = vmatprep.subr.mxu0 0.0
          %368 = vmatpush1.msra.mxu0 0.0
          %369 = vmatprep.subr.mxu0 0.0
          %370 = vmatpush1.msra.mxu0 0.0
          %371 = vmatprep.subr.mxu0 0.0
          %372 = vmatpush1.msra.mxu0 0.0
          %373 = vmatprep.subr.mxu0 0.0
          %374 = vmatpush1.msra.mxu0 0.0
          %375 = vmatprep.subr.mxu0 0.0
          %376 = vmatpush1.msra.mxu0 0.0
          %377 = vmatprep.subr.mxu0 0.0
          %378 = vmatpush1.msra.mxu0 0.0
          %379 = vmatprep.subr.mxu0 0.0
          %380 = vmatpush1.msra.mxu0 0.0
          %381 = vmatprep.subr.mxu0 0.0
          %382 = vmatpush1.msra.mxu0 0.0
          %383 = vmatprep.subr.mxu0 0.0
          %384 = vmatpush1.msra.mxu0 0.0
          %385 = vmatprep.subr.mxu0 0.0
          %386 = vmatpush1.msra.mxu0 0.0
          %387 = vmatprep.subr.mxu0 0.0
          %388 = vmatpush1.msra.mxu0 %v351
          %389 = vmatprep.subr.mxu0 0.0
          %390 = vmatpush1.msra.mxu0 %v350
          %391 = vmatprep.subr.mxu0 0.0
          %392 = vmatpush1.msra.mxu0 %v349
          %393 = vmatprep.subr.mxu0 0.0
          %394 = vmatpush1.msra.mxu0 %v348
          %395 = vmatprep.subr.mxu0 0.0
          %396 = vmatpush2.msra.mxu0 0.0
          %397 = vmatprep.subr.mxu0 0.0
          %398 = vmatpush2.msra.mxu0 0.0
          %399 = vmatprep.subr.mxu0 0.0
          %400 = vmatpush2.msra.mxu0 0.0
          %401 = vmatprep.subr.mxu0 0.0
          %402 = vmatpush2.msra.mxu0 0.0
          %403 = vmatprep.subr.mxu0 0.0
          %404 = vmatpush2.msra.mxu0 0.0
          %405 = vmatprep.subr.mxu0 0.0
          %406 = vmatpush2.msra.mxu0 0.0
          %407 = vmatprep.subr.mxu0 0.0
          %408 = vmatpush2.msra.mxu0 0.0
          %409 = vmatprep.subr.mxu0 0.0
          %410 = vmatpush2.msra.mxu0 0.0
          %411 = vmatprep.subr.mxu0 0.0
          %412 = vmatpush2.msra.mxu0 0.0
          %413 = vmatprep.subr.mxu0 0.0
          %414 = vmatpush2.msra.mxu0 0.0
          %415 = vmatprep.subr.mxu0 0.0
          %416 = vmatpush2.msra.mxu0 0.0
          %417 = vmatprep.subr.mxu0 0.0
          %418 = vmatpush2.msra.mxu0 0.0
          %419 = vmatprep.subr.mxu0 0.0
          %420 = vmatpush2.msra.mxu0 0.0
          %421 = vmatprep.subr.mxu0 0.0
          %422 = vmatpush2.msra.mxu0 0.0
          %423 = vmatprep.subr.mxu0 0.0
          %424 = vmatpush2.msra.mxu0 0.0
          %425 = vmatprep.subr.mxu0 0.0
          %426 = vmatpush2.msra.mxu0 0.0
          %427 = vmatprep.mubr.f32.mxu0 0.0
          %428 = vmatmul.mubr.f32.gmra.mxu0 %v361
          %v429 = vpop.f32.mrf.mxu0
          %v430 = vadd.f32 %v357, %v429
          %v431 = vpop.f32.mrf.mxu0
          %432 = vdwg.mxu0
          %v433 = vmax.f32 %v430, 0.0
          %v434 = vld [vmem:[%s3] sm:$0xff]
          %v435 = vld [vmem:[%s3 + $0x8] sm:$0xff]
          %v436 = vld [vmem:[%s3 + $0x10] sm:$0xff]
          %v437 = vld [vmem:[%s3 + $0x18] sm:$0xff]
          %v438 = vld [vmem:[%s4] sm:$0x1]
          %v440 = vlaneseq
          %v441 = vshrl.u32 %v440, 7
          %v442 = vsub.s32 0, %v441
          %v443 = vrot.slane %v438, %v442
          %v446 = vsel %vm359, %v433, 0
          %448 = vmatprep.subr.mxu0 0.0
          %449 = vmatpush1.msra.mxu0 0.0
          %450 = vmatprep.subr.mxu0 0.0
          %451 = vmatpush1.msra.mxu0 0.0
          %452 = vmatprep.subr.mxu0 0.0
          %453 = vmatpush1.msra.mxu0 0.0
          %454 = vmatprep.subr.mxu0 0.0
          %455 = vmatpush1.msra.mxu0 0.0
          %456 = vmatprep.subr.mxu0 0.0
          %457 = vmatpush1.msra.mxu0 0.0
          %458 = vmatprep.subr.mxu0 0.0
          %459 = vmatpush1.msra.mxu0 0.0
          %460 = vmatprep.subr.mxu0 0.0
          %461 = vmatpush1.msra.mxu0 0.0
          %462 = vmatprep.subr.mxu0 0.0
          %463 = vmatpush1.msra.mxu0 0.0
          %464 = vmatprep.subr.mxu0 0.0
          %465 = vmatpush1.msra.mxu0 0.0
          %466 = vmatprep.subr.mxu0 0.0
          %467 = vmatpush1.msra.mxu0 0.0
          %468 = vmatprep.subr.mxu0 0.0
          %469 = vmatpush1.msra.mxu0 0.0
          %470 = vmatprep.subr.mxu0 0.0
          %471 = vmatpush1.msra.mxu0 0.0
          %472 = vmatprep.subr.mxu0 0.0
          %473 = vmatpush1.msra.mxu0 %v437
          %474 = vmatprep.subr.mxu0 0.0
          %475 = vmatpush1.msra.mxu0 %v436
          %476 = vmatprep.subr.mxu0 0.0
          %477 = vmatpush1.msra.mxu0 %v435
          %478 = vmatprep.subr.mxu0 0.0
          %479 = vmatpush1.msra.mxu0 %v434
          %480 = vmatprep.subr.mxu0 0.0
          %481 = vmatpush2.msra.mxu0 0.0
          %482 = vmatprep.subr.mxu0 0.0
          %483 = vmatpush2.msra.mxu0 0.0
          %484 = vmatprep.subr.mxu0 0.0
          %485 = vmatpush2.msra.mxu0 0.0
          %486 = vmatprep.subr.mxu0 0.0
          %487 = vmatpush2.msra.mxu0 0.0
          %488 = vmatprep.subr.mxu0 0.0
          %489 = vmatpush2.msra.mxu0 0.0
          %490 = vmatprep.subr.mxu0 0.0
          %491 = vmatpush2.msra.mxu0 0.0
          %492 = vmatprep.subr.mxu0 0.0
          %493 = vmatpush2.msra.mxu0 0.0
          %494 = vmatprep.subr.mxu0 0.0
          %495 = vmatpush2.msra.mxu0 0.0
          %496 = vmatprep.subr.mxu0 0.0
          %497 = vmatpush2.msra.mxu0 0.0
          %498 = vmatprep.subr.mxu0 0.0
          %499 = vmatpush2.msra.mxu0 0.0
          %500 = vmatprep.subr.mxu0 0.0
          %501 = vmatpush2.msra.mxu0 0.0
          %502 = vmatprep.subr.mxu0 0.0
          %503 = vmatpush2.msra.mxu0 0.0
          %504 = vmatprep.subr.mxu0 0.0
          %505 = vmatpush2.msra.mxu0 0.0
          %506 = vmatprep.subr.mxu0 0.0
          %507 = vmatpush2.msra.mxu0 0.0
          %508 = vmatprep.subr.mxu0 0.0
          %509 = vmatpush2.msra.mxu0 0.0
          %510 = vmatprep.subr.mxu0 0.0
          %511 = vmatpush2.msra.mxu0 0.0
          %512 = vmatprep.mubr.f32.mxu0 0.0
          %513 = vmatmul.mubr.f32.gmra.mxu0 %v446
          %v514 = vpop.f32.mrf.mxu0
          %v515 = vadd.f32 %v443, %v514
          %v516 = vpop.f32.mrf.mxu0
          %517 = vdwg.mxu0
          %vm518 = vcmask 254976
          %519 = vst.msk [vmem:[#allocation4] sm:$0x3] %vm518, %v515
        $region90: #{tpu_custom_call.1} parent=73 // pred_fallthru
          _
        // Predicated region
        $region91: #{tpu_custom_call.1} parent=73 // pred_check
          %p520 = pneg %p159
        $region92: #{tpu_custom_call.1} parent=73 // pred_check_branch
          %522 = sbr.rel (%p520) target = $region94
        $region93: #{tpu_custom_call.1} parent=73 // pred_region
          %s524 = ssub.s32 32, 32
          %525 = vsyncadd [#allocation5], %s524
          %s526 = smul.addr %s21, 32
          %s527 = scalar_lea.hbm %s5, %s526
          %s529 = sshll.u32 [#allocation4], 4
          %s530 = int_to_ptr.vmem [resolvable:$true] %s529
          %532 = dma.vmem_to_hbm [thread:$0]  %s530, 32, %s527, [#allocation5]
        $region94: #{tpu_custom_call.1} parent=73 // pred_fallthru
          _
        // Predicated region
        $region95: #{tpu_custom_call.1} parent=73 // pred_check
          %p533 = pneg %p159
        $region96: #{tpu_custom_call.1} parent=73 // pred_check_branch
          %535 = sbr.rel (%p533) target = $region98
        $region97: #{tpu_custom_call.1} parent=73 // pred_region
          %536 = dma.done [#allocation5], 32
        $region98: #{tpu_custom_call.1} parent=73 // pred_fallthru
          _
      $region74: #{tpu_custom_call.1} parent=5 // pred_fallthru
        _
      %p537 = scmp.le.s32.totalorder 2, %s12
      // Predicated region
      $region99: #{tpu_custom_call.1} parent=5 // pred_check
        %p538 = pneg %p537
      $region100: #{tpu_custom_call.1} parent=5 // pred_check_branch
        %540 = sbr.rel (%p538) target = $region102
      $region101: #{tpu_custom_call.1} parent=5 // pred_region
        %s541 = ssub.s32 %s12, 2
      $region102: #{tpu_custom_call.1} parent=5 // pred_fallthru
        _
    $region6: #{tpu_custom_call.1} parent=1 // loop_footer
      %s16 = sadd.s32 1, %s12
    $region7: #{tpu_custom_call.1} parent=1 // loop_footer_branch
      %11 = sbr.rel target = $region3
    $region8: #{tpu_custom_call.1} parent=1 // loop_exit
      _
    %542 = vsyncpa [#allocation5], 1
    %s543 = scalar_lea.sflag [#allocation5], 1
    %544 = vsyncpa %s543, 1

</llo_original>
